<compile_context>
chip_gen: v6e
topology: v6e:2x2x1
jax: 0.10.0
libtpu: 0.0.40
codegen_flags: <defaults>
</compile_context>

<pallas_src>
import jax
import jax.numpy as jnp
from jax.experimental import pallas as pl
from jax.experimental.pallas import tpu as pltpu


def _self_attention_kernel(x_ref, m_ref, w1_ref, b1_ref, w2_ref, exp_ref, red_ref, o_ref):
    # x_ref  : (TN, W*H)  lane-packed tokens for TN flattened (batch*edu) rows
    # m_ref  : (TN, W)    word mask for those rows (f32, 0/1)
    # w1_ref : (W*H, W*H) block-diagonal kron(I_W, ws1.W^T)
    # b1_ref : (1, W*H)   ws1 bias tiled W times
    # w2_ref : (W*H, W)   block-diagonal kron(I_W, ws2.W^T); ws2 bias omitted
    # exp_ref: (W, W*H)   kron(I_W, ones(1, H))  -- attn broadcast to word groups
    # red_ref: (W*H, H)   kron(ones(W, 1), I_H)  -- word-group sum
    # o_ref  : (TN, H)    weighted embedding output
    x = x_ref[...]                                                  # (TN, W*H), compute dtype

    # tanh(ws1(drop(x))) for every word in one block-diagonal MXU matmul + one tanh.
    h = jnp.tanh(
        jnp.dot(x, w1_ref[...], preferred_element_type=jnp.float32) + b1_ref[...]
    )                                                               # (TN, W*H) f32

    # ws2(drop(h)) as a second small MXU matmul; logits land lane-laid-out as (TN, W).
    logits = jnp.dot(h, w2_ref[...], preferred_element_type=jnp.float32)   # (TN, W)
    # Additive word mask: -10000 where word_mask == 0 (matches the PyTorch reference).
    logits = logits + (-10000.0) * (m_ref[...] == 0.0).astype(jnp.float32)

    # Softmax over the word axis (lanes).
    lmax = jnp.max(logits, axis=-1, keepdims=True)
    e = jnp.exp(logits - lmax)
    attn = e / jnp.sum(e, axis=-1, keepdims=True)                   # (TN, W) f32

    # Weighted sum of the word embeddings, kept dense on the lanes:
    #   broadcast attn to the W*H lanes (MXU), one dense multiply (VPU),
    #   then sum the W word-groups with a (W*H, H) reducer matmul (MXU).
    attn_exp = jnp.dot(attn, exp_ref[...], preferred_element_type=jnp.float32)  # (TN, W*H)
    p = x.astype(jnp.float32) * attn_exp                            # (TN, W*H) f32
    out = jnp.dot(p, red_ref[...], preferred_element_type=jnp.float32)          # (TN, H)
    o_ref[...] = out.astype(o_ref.dtype)


def self_attention(x, word_mask, w1, b1, w2, b2, *, block_rows=4096, use_bf16=False):
    """x: (B, E, W, H) f32; word_mask: (B, E, W). Returns (B*E, H) f32."""
    B, E, W, H = x.shape
    N = B * E
    WH = W * H
    compute_dtype = jnp.bfloat16 if use_bf16 else jnp.float32

    # Lane-pack the (W, H) inner dims into a dense row of W*H lanes.
    x2 = x.reshape(N, WH).astype(compute_dtype)
    m2 = word_mask.reshape(N, W).astype(jnp.float32)

    # Row tile: whole rows only (a per-row softmax never spans a block boundary),
    # multiple of 8 sublanes, and split into >= 2 grid steps whenever possible so
    # both v7x TensorCores get a share of the 'parallel' axis.
    tn = min(block_rows, -(-N // 2))
    tn = max(8, ((tn + 7) // 8) * 8)
    n_pad = pl.cdiv(N, tn) * tn
    if n_pad != N:  # zero-padded rows produce finite garbage, sliced off below
        x2 = jnp.pad(x2, ((0, n_pad - N), (0, 0)))
        m2 = jnp.pad(m2, ((0, n_pad - N), (0, 0)))

    # Packed weights (built once, outside the kernel).
    eye_w = jnp.eye(W, dtype=jnp.float32)
    w1blk = jnp.kron(eye_w, w1.T.astype(jnp.float32)).astype(compute_dtype)      # (WH, WH)
    b1t = jnp.tile(b1.astype(jnp.float32), W).reshape(1, WH)                     # (1, WH)
    w2blk = jnp.kron(eye_w, w2.reshape(H, 1).astype(jnp.float32))                # (WH, W)
    expander = jnp.kron(eye_w, jnp.ones((1, H), jnp.float32))                    # (W, WH)
    reducer = jnp.kron(jnp.ones((W, 1), jnp.float32),
                       jnp.eye(H, dtype=jnp.float32))                            # (WH, H)
    del b2  # uniform shift before softmax: cancels exactly

    out = pl.pallas_call(
        _self_attention_kernel,
        out_shape=jax.ShapeDtypeStruct((n_pad, H), jnp.float32),
        grid_spec=pltpu.PrefetchScalarGridSpec(
            num_scalar_prefetch=0,
            grid=(n_pad // tn,),
            in_specs=[
                pl.BlockSpec((tn, WH), lambda i: (i, 0)),   # lane-packed tokens
                pl.BlockSpec((tn, W), lambda i: (i, 0)),    # word mask
                pl.BlockSpec((WH, WH), lambda i: (0, 0)),   # block-diag ws1^T
                pl.BlockSpec((1, WH), lambda i: (0, 0)),    # tiled ws1 bias
                pl.BlockSpec((WH, W), lambda i: (0, 0)),    # block-diag ws2^T
                pl.BlockSpec((W, WH), lambda i: (0, 0)),    # attn expander
                pl.BlockSpec((WH, H), lambda i: (0, 0)),    # word-group reducer
            ],
            out_specs=pl.BlockSpec((tn, H), lambda i: (i, 0)),
        ),
        compiler_params=pltpu.CompilerParams(
            dimension_semantics=("parallel",),
            vmem_limit_bytes=48 * 1024 * 1024,
        ),
    )(x2, m2, w1blk, b1t, w2blk, expander, reducer)
    return out[:N]


def _reference(x, word_mask, w1, b1, w2, b2):
    B, E, W, H = x.shape
    N = B * E
    x2 = x.reshape(N, W, H)
    m2 = word_mask.reshape(N, W)
    sa = jnp.tanh(x2 @ w1.T + b1)
    sa = (sa @ w2.T + b2)[..., 0]
    sa = sa + (-10000.0) * (m2 == 0).astype(jnp.float32)
    sa = jax.nn.softmax(sa, axis=1)
    return jnp.sum(x2 * sa[..., None], axis=1)


if __name__ == "__main__":
    key = jax.random.PRNGKey(0)
    B, E, W, H = 2, 4, 8, 32
    k1, k2, k3, k4, k5, k6, k7, k8 = jax.random.split(key, 8)

    # Deterministic parameter init (PyTorch Linear-style uniform bounds).
    bound = 1.0 / (H ** 0.5)
    w1 = jax.random.uniform(k3, (H, H), jnp.float32, -bound, bound)
    b1 = jax.random.uniform(k4, (H,), jnp.float32, -bound, bound)
    w2 = jax.random.uniform(k5, (1, H), jnp.float32, -bound, bound)
    b2 = jax.random.uniform(k6, (1,), jnp.float32, -bound, bound)

    # Small shape: single-block path.
    x = jax.random.normal(k1, (B, E, W, H), dtype=jnp.float32)
    word_mask = (jax.random.uniform(k2, (B, E, W)) > 0.25).astype(jnp.float32)
    word_mask = word_mask.at[..., 0].set(1.0)   # ensure >=1 valid word per row
    out = jax.block_until_ready(self_attention(x, word_mask, w1, b1, w2, b2))
    ref = _reference(x, word_mask, w1, b1, w2, b2)
    assert out.shape == (B * E, H)
    assert jnp.allclose(out, ref, atol=1e-4, rtol=1e-4), "small-shape mismatch vs reference"

    # Modest batched shape: exercises the multi-step grid + row-padding path.
    B2, E2 = 2, 300                              # N = 600 rows
    xb = jax.random.normal(k7, (B2, E2, W, H), dtype=jnp.float32)
    mb = (jax.random.uniform(k8, (B2, E2, W)) > 0.25).astype(jnp.float32)
    mb = mb.at[..., 0].set(1.0)
    outb = jax.block_until_ready(self_attention(xb, mb, w1, b1, w2, b2, block_rows=256))
    refb = _reference(xb, mb, w1, b1, w2, b2)
    assert outb.shape == (B2 * E2, H)
    assert jnp.allclose(outb, refb, atol=1e-4, rtol=1e-4), "batched-shape mismatch vs reference"

    # Optional bf16 fast path (halves HBM traffic / uses the bf16 MXU): loose tolerance.
    outb16 = jax.block_until_ready(
        self_attention(xb, mb, w1, b1, w2, b2, block_rows=256, use_bf16=True))
    assert outb16.shape == (B2 * E2, H)
    assert jnp.allclose(outb16, refb, atol=5e-2, rtol=5e-2), "bf16-path mismatch vs reference"

    print("KERNEL_OK")
</pallas_src>

<mosaic_0001>
module attributes {stable_mosaic.version = 11 : i64} {
  func.func @_self_attention_kernel(%arg0: i32, %arg1: memref<8x256xf32, #tpu.memory_space<vmem>>, %arg2: memref<8x8xf32, #tpu.memory_space<vmem>>, %arg3: memref<256x256xf32, #tpu.memory_space<vmem>>, %arg4: memref<1x256xf32, #tpu.memory_space<vmem>>, %arg5: memref<256x8xf32, #tpu.memory_space<vmem>>, %arg6: memref<8x256xf32, #tpu.memory_space<vmem>>, %arg7: memref<256x32xf32, #tpu.memory_space<vmem>>, %arg8: memref<8x32xf32, #tpu.memory_space<vmem>>) attributes {dimension_semantics = [#tpu.dimension_semantics<parallel>], iteration_bounds = array<i64: 1>, scalar_prefetch = 0 : i64, scratch_operands = 0 : i64, tpu.core_type = #tpu.core_type<tc>, window_params = [{transform_indices = @transform_0, window_bounds = array<i64: 8, 256>}, {transform_indices = @transform_1, window_bounds = array<i64: 8, 8>}, {pipeline_mode = #tpu.pipeline_mode<synchronous>, transform_indices = @transform_2, window_bounds = array<i64: 256, 256>}, {pipeline_mode = #tpu.pipeline_mode<synchronous>, transform_indices = @transform_3, window_bounds = array<i64: 1, 256>}, {pipeline_mode = #tpu.pipeline_mode<synchronous>, transform_indices = @transform_4, window_bounds = array<i64: 256, 8>}, {pipeline_mode = #tpu.pipeline_mode<synchronous>, transform_indices = @transform_5, window_bounds = array<i64: 8, 256>}, {pipeline_mode = #tpu.pipeline_mode<synchronous>, transform_indices = @transform_6, window_bounds = array<i64: 256, 32>}, {transform_indices = @transform_7, window_bounds = array<i64: 8, 32>}]} {
    %c0 = arith.constant 0 : index
    %c0_0 = arith.constant 0 : index
    %0 = vector.load %arg1[%c0, %c0_0] : memref<8x256xf32, #tpu.memory_space<vmem>>, vector<8x256xf32>
    %c0_1 = arith.constant 0 : index
    %c0_2 = arith.constant 0 : index
    %1 = vector.load %arg3[%c0_1, %c0_2] : memref<256x256xf32, #tpu.memory_space<vmem>>, vector<256x256xf32>
    %cst = arith.constant dense<0.000000e+00> : vector<8x256xf32>
    %2 = tpu.matmul %0, %1, %cst {dimension_numbers = #tpu.dot_dimension_numbers<[1], [0], [0], [1], [0, 0, 1, 1], [], []>} : vector<8x256xf32>, vector<256x256xf32>, vector<8x256xf32> -> vector<8x256xf32>
    %c0_3 = arith.constant 0 : index
    %c0_4 = arith.constant 0 : index
    %3 = vector.load %arg4[%c0_3, %c0_4] : memref<1x256xf32, #tpu.memory_space<vmem>>, vector<1x256xf32>
    %4 = vector.broadcast %3 : vector<1x256xf32> to vector<8x256xf32>
    %5 = arith.addf %2, %4 : vector<8x256xf32>
    %6 = math.tanh %5 : vector<8x256xf32>
    %c0_5 = arith.constant 0 : index
    %c0_6 = arith.constant 0 : index
    %7 = vector.load %arg5[%c0_5, %c0_6] : memref<256x8xf32, #tpu.memory_space<vmem>>, vector<256x8xf32>
    %cst_7 = arith.constant dense<0.000000e+00> : vector<8x8xf32>
    %8 = tpu.matmul %6, %7, %cst_7 {dimension_numbers = #tpu.dot_dimension_numbers<[1], [0], [0], [1], [0, 0, 1, 1], [], []>} : vector<8x256xf32>, vector<256x8xf32>, vector<8x8xf32> -> vector<8x8xf32>
    %c0_8 = arith.constant 0 : index
    %c0_9 = arith.constant 0 : index
    %9 = vector.load %arg2[%c0_8, %c0_9] : memref<8x8xf32, #tpu.memory_space<vmem>>, vector<8x8xf32>
    %cst_10 = arith.constant 0.000000e+00 : f32
    %10 = vector.broadcast %cst_10 : f32 to vector<8x8xf32>
    %11 = arith.cmpf oeq, %9, %10 : vector<8x8xf32>
    %12 = arith.extui %11 : vector<8x8xi1> to vector<8x8xi32>
    %13 = arith.sitofp %12 : vector<8x8xi32> to vector<8x8xf32>
    %cst_11 = arith.constant -1.000000e+04 : f32
    %14 = vector.broadcast %cst_11 : f32 to vector<8x8xf32>
    %15 = arith.mulf %14, %13 : vector<8x8xf32>
    %16 = arith.addf %8, %15 : vector<8x8xf32>
    %cst_12 = arith.constant dense<0xFF800000> : vector<8xf32>
    %17 = vector.multi_reduction <maximumf>, %16, %cst_12 [1] : vector<8x8xf32> to vector<8xf32>
    %18 = vector.shape_cast %17 : vector<8xf32> to vector<8x1xf32>
    %19 = vector.broadcast %18 : vector<8x1xf32> to vector<8x8xf32>
    %20 = arith.subf %16, %19 : vector<8x8xf32>
    %21 = math.exp %20 : vector<8x8xf32>
    %cst_13 = arith.constant dense<0.000000e+00> : vector<8xf32>
    %22 = vector.multi_reduction <add>, %21, %cst_13 [1] : vector<8x8xf32> to vector<8xf32>
    %23 = vector.shape_cast %22 : vector<8xf32> to vector<8x1xf32>
    %24 = vector.broadcast %23 : vector<8x1xf32> to vector<8x8xf32>
    %25 = arith.divf %21, %24 : vector<8x8xf32>
    %c0_14 = arith.constant 0 : index
    %c0_15 = arith.constant 0 : index
    %26 = vector.load %arg6[%c0_14, %c0_15] : memref<8x256xf32, #tpu.memory_space<vmem>>, vector<8x256xf32>
    %cst_16 = arith.constant dense<0.000000e+00> : vector<8x256xf32>
    %27 = tpu.matmul %25, %26, %cst_16 {dimension_numbers = #tpu.dot_dimension_numbers<[1], [0], [0], [1], [0, 0, 1, 1], [], []>} : vector<8x8xf32>, vector<8x256xf32>, vector<8x256xf32> -> vector<8x256xf32>
    %28 = arith.mulf %0, %27 : vector<8x256xf32>
    %c0_17 = arith.constant 0 : index
    %c0_18 = arith.constant 0 : index
    %29 = vector.load %arg7[%c0_17, %c0_18] : memref<256x32xf32, #tpu.memory_space<vmem>>, vector<256x32xf32>
    %cst_19 = arith.constant dense<0.000000e+00> : vector<8x32xf32>
    %30 = tpu.matmul %28, %29, %cst_19 {dimension_numbers = #tpu.dot_dimension_numbers<[1], [0], [0], [1], [0, 0, 1, 1], [], []>} : vector<8x256xf32>, vector<256x32xf32>, vector<8x32xf32> -> vector<8x32xf32>
    %c0_20 = arith.constant 0 : index
    %c0_21 = arith.constant 0 : index
    %31 = vector.load %arg8[%c0_20, %c0_21] : memref<8x32xf32, #tpu.memory_space<vmem>>, vector<8x32xf32>
    tpu.vector_store %arg8[%c0_20, %c0_21], %30 {strides = array<i32>} : memref<8x32xf32, #tpu.memory_space<vmem>>, vector<8x32xf32>,
    return
  }
  func.func @transform_0(%arg0: i32) -> (i32, i32) {
    %c0_i32 = arith.constant 0 : i32
    %c0_i32_0 = arith.constant 0 : i32
    return %arg0, %c0_i32 : i32, i32
  }
  func.func @transform_1(%arg0: i32) -> (i32, i32) {
    %c0_i32 = arith.constant 0 : i32
    %c0_i32_0 = arith.constant 0 : i32
    return %arg0, %c0_i32 : i32, i32
  }
  func.func @transform_2(%arg0: i32) -> (i32, i32) {
    %c0_i32 = arith.constant 0 : i32
    %c0_i32_0 = arith.constant 0 : i32
    %c0_i32_1 = arith.constant 0 : i32
    return %c0_i32, %c0_i32_0 : i32, i32
  }
  func.func @transform_3(%arg0: i32) -> (i32, i32) {
    %c0_i32 = arith.constant 0 : i32
    %c0_i32_0 = arith.constant 0 : i32
    %c0_i32_1 = arith.constant 0 : i32
    return %c0_i32, %c0_i32_0 : i32, i32
  }
  func.func @transform_4(%arg0: i32) -> (i32, i32) {
    %c0_i32 = arith.constant 0 : i32
    %c0_i32_0 = arith.constant 0 : i32
    %c0_i32_1 = arith.constant 0 : i32
    return %c0_i32, %c0_i32_0 : i32, i32
  }
  func.func @transform_5(%arg0: i32) -> (i32, i32) {
    %c0_i32 = arith.constant 0 : i32
    %c0_i32_0 = arith.constant 0 : i32
    %c0_i32_1 = arith.constant 0 : i32
    return %c0_i32, %c0_i32_0 : i32, i32
  }
  func.func @transform_6(%arg0: i32) -> (i32, i32) {
    %c0_i32 = arith.constant 0 : i32
    %c0_i32_0 = arith.constant 0 : i32
    %c0_i32_1 = arith.constant 0 : i32
    return %c0_i32, %c0_i32_0 : i32, i32
  }
  func.func @transform_7(%arg0: i32) -> (i32, i32) {
    %c0_i32 = arith.constant 0 : i32
    %c0_i32_0 = arith.constant 0 : i32
    return %arg0, %c0_i32 : i32, i32
  }
}

</mosaic_0001>

<llo_original>
// kernel: tpu_custom_call.1
$region0: #{tpu_custom_call.1}
  #allocation0 [shape = 'u32[]', space=smem, size = 0x4, offset = 0x4, fixed_abs, tag = 'smem constant byte address 0x4 - core index']
  #allocation1 [shape = 'u32[144,128]{1,0:T(1,128)}', space=vmem, size = 0x12000, scoped, tag = 'internal scratch']
  %s0 = inlined_call_operand.vmem [shape: f32[8,256], index: 0, kind: input, shape index: {}]
  %s1 = inlined_call_operand.hbm [shape: f32[8,8], index: 1, kind: input, shape index: {}]
  %s2 = inlined_call_operand.vmem [shape: f32[256,256], index: 2, kind: input, shape index: {}]
  %s3 = inlined_call_operand.vmem [shape: f32[1,256], index: 3, kind: input, shape index: {}]
  %s4 = inlined_call_operand.vmem [shape: f32[256,8], index: 4, kind: input, shape index: {}]
  %s5 = inlined_call_operand.hbm [shape: f32[8,256], index: 5, kind: input, shape index: {}]
  %s6 = inlined_call_operand.vmem [shape: f32[256,32], index: 6, kind: input, shape index: {}]
  %s7 = inlined_call_operand.hbm [shape: f32[8,32], index: 7, kind: output, shape index: {}]
  %s8 = sld [smem:[#allocation0]]
  $region46: #{tpu_custom_call.1} parent=0
    _
  %s10 = ssub.s32 1, %s8
  %s11 = scalar_select 0, %s10, %s8
  $region1: #{tpu_custom_call.1} parent=0
    #allocation2 [shape = 'u8[4096]{0}', space=vmem, size = 0x1000, scoped, tag = 'input window, operand 1, single buffered']
    #allocation3 [shape = 's32[1]{0}', space=sflag, size = 0x4, scoped, tag = 'scoped memory for tpu_custom_call.1']
    #allocation4 [shape = 's32[1]{0}', space=sflag, size = 0x4, scoped, tag = 'scoped memory for tpu_custom_call.1']
    #allocation5 [shape = 'u8[8192]{0}', space=vmem, size = 0x2000, scoped, tag = 'input window, operand 5, single buffered']
    #allocation6 [shape = 's32[1]{0}', space=sflag, size = 0x4, scoped, tag = 'scoped memory for tpu_custom_call.1']
    #allocation7 [shape = 'u8[4096]{0}', space=vmem, size = 0x1000, scoped, tag = 'output window, operand 0, single buffered']
    %12 = vsyncpa [#allocation3], 0
    %13 = vsyncpa [#allocation6], 0
    %14 = vsyncpa [#allocation4], 0
    // Predicated region
    $region2: #{tpu_custom_call.1} parent=1 // pred_check
      _
    $region3: #{tpu_custom_call.1} parent=1 // pred_check_branch
      %16 = sbr.rel (0) target = $region5
    $region4: #{tpu_custom_call.1} parent=1 // pred_region
      _
    $region5: #{tpu_custom_call.1} parent=1 // pred_fallthru
      _
    // Predicated region
    $region6: #{tpu_custom_call.1} parent=1 // pred_check
      _
    $region7: #{tpu_custom_call.1} parent=1 // pred_check_branch
      %18 = sbr.rel (0) target = $region9
    $region8: #{tpu_custom_call.1} parent=1 // pred_region
      %s20 = ssub.s32 128, 128
      %21 = vsyncadd [#allocation3], %s20
      %s23 = sshll.u32 [#allocation2], 4
      %s24 = int_to_ptr.vmem [resolvable:$true] %s23
      %26 = dma.hbm_to_vmem [thread:$0]  %s1, 128, %s24, [#allocation3]
    $region9: #{tpu_custom_call.1} parent=1 // pred_fallthru
      _
    // Predicated region
    $region10: #{tpu_custom_call.1} parent=1 // pred_check
      _
    $region11: #{tpu_custom_call.1} parent=1 // pred_check_branch
      %28 = sbr.rel (0) target = $region13
    $region12: #{tpu_custom_call.1} parent=1 // pred_region
      _
    $region13: #{tpu_custom_call.1} parent=1 // pred_fallthru
      _
    // Predicated region
    $region14: #{tpu_custom_call.1} parent=1 // pred_check
      _
    $region15: #{tpu_custom_call.1} parent=1 // pred_check_branch
      %30 = sbr.rel (0) target = $region17
    $region16: #{tpu_custom_call.1} parent=1 // pred_region
      _
    $region17: #{tpu_custom_call.1} parent=1 // pred_fallthru
      _
    // Predicated region
    $region18: #{tpu_custom_call.1} parent=1 // pred_check
      _
    $region19: #{tpu_custom_call.1} parent=1 // pred_check_branch
      %32 = sbr.rel (0) target = $region21
    $region20: #{tpu_custom_call.1} parent=1 // pred_region
      _
    $region21: #{tpu_custom_call.1} parent=1 // pred_fallthru
      _
    // Predicated region
    $region22: #{tpu_custom_call.1} parent=1 // pred_check
      _
    $region23: #{tpu_custom_call.1} parent=1 // pred_check_branch
      %34 = sbr.rel (0) target = $region25
    $region24: #{tpu_custom_call.1} parent=1 // pred_region
      %s36 = ssub.s32 256, 256
      %37 = vsyncadd [#allocation6], %s36
      %s39 = sshll.u32 [#allocation5], 4
      %s40 = int_to_ptr.vmem [resolvable:$true] %s39
      %42 = dma.hbm_to_vmem [thread:$0]  %s5, 256, %s40, [#allocation6]
    $region25: #{tpu_custom_call.1} parent=1 // pred_fallthru
      _
    // Predicated region
    $region26: #{tpu_custom_call.1} parent=1 // pred_check
      _
    $region27: #{tpu_custom_call.1} parent=1 // pred_check_branch
      %44 = sbr.rel (0) target = $region29
    $region28: #{tpu_custom_call.1} parent=1 // pred_region
      _
    $region29: #{tpu_custom_call.1} parent=1 // pred_fallthru
      _
    // Predicated region
    $region30: #{tpu_custom_call.1} parent=1 // pred_check
      _
    $region31: #{tpu_custom_call.1} parent=1 // pred_check_branch
      %46 = sbr.rel (0) target = $region33
    $region32: #{tpu_custom_call.1} parent=1 // pred_region
      %47 = dma.done [#allocation3], 128
    $region33: #{tpu_custom_call.1} parent=1 // pred_fallthru
      _
    // Predicated region
    $region34: #{tpu_custom_call.1} parent=1 // pred_check
      _
    $region35: #{tpu_custom_call.1} parent=1 // pred_check_branch
      %49 = sbr.rel (0) target = $region37
    $region36: #{tpu_custom_call.1} parent=1 // pred_region
      %50 = dma.done [#allocation6], 256
    $region37: #{tpu_custom_call.1} parent=1 // pred_fallthru
      _
    %v51 = vld [vmem:[%s0] sm:$0xff]
    %v52 = vld [vmem:[%s0 + $0x8] sm:$0xff]
    %v53 = vld [vmem:[%s2] sm:$0xff]
    %v54 = vld [vmem:[%s2 + $0x8] sm:$0xff]
    %v55 = vld [vmem:[%s2 + $0x10] sm:$0xff]
    %v56 = vld [vmem:[%s2 + $0x18] sm:$0xff]
    %v57 = vld [vmem:[%s2 + $0x20] sm:$0xff]
    %v58 = vld [vmem:[%s2 + $0x28] sm:$0xff]
    %v59 = vld [vmem:[%s2 + $0x30] sm:$0xff]
    %v60 = vld [vmem:[%s2 + $0x38] sm:$0xff]
    %v61 = vld [vmem:[%s2 + $0x40] sm:$0xff]
    %v62 = vld [vmem:[%s2 + $0x48] sm:$0xff]
    %v63 = vld [vmem:[%s2 + $0x50] sm:$0xff]
    %v64 = vld [vmem:[%s2 + $0x58] sm:$0xff]
    %v65 = vld [vmem:[%s2 + $0x60] sm:$0xff]
    %v66 = vld [vmem:[%s2 + $0x68] sm:$0xff]
    %v67 = vld [vmem:[%s2 + $0x70] sm:$0xff]
    %v68 = vld [vmem:[%s2 + $0x78] sm:$0xff]
    %v69 = vld [vmem:[%s2 + $0x80] sm:$0xff]
    %v70 = vld [vmem:[%s2 + $0x88] sm:$0xff]
    %v71 = vld [vmem:[%s2 + $0x90] sm:$0xff]
    %v72 = vld [vmem:[%s2 + $0x98] sm:$0xff]
    %v73 = vld [vmem:[%s2 + $0xa0] sm:$0xff]
    %v74 = vld [vmem:[%s2 + $0xa8] sm:$0xff]
    %v75 = vld [vmem:[%s2 + $0xb0] sm:$0xff]
    %v76 = vld [vmem:[%s2 + $0xb8] sm:$0xff]
    %v77 = vld [vmem:[%s2 + $0xc0] sm:$0xff]
    %v78 = vld [vmem:[%s2 + $0xc8] sm:$0xff]
    %v79 = vld [vmem:[%s2 + $0xd0] sm:$0xff]
    %v80 = vld [vmem:[%s2 + $0xd8] sm:$0xff]
    %v81 = vld [vmem:[%s2 + $0xe0] sm:$0xff]
    %v82 = vld [vmem:[%s2 + $0xe8] sm:$0xff]
    %v83 = vld [vmem:[%s2 + $0xf0] sm:$0xff]
    %v84 = vld [vmem:[%s2 + $0xf8] sm:$0xff]
    %v85 = vld [vmem:[%s2 + $0x100] sm:$0xff]
    %v86 = vld [vmem:[%s2 + $0x108] sm:$0xff]
    %v87 = vld [vmem:[%s2 + $0x110] sm:$0xff]
    %v88 = vld [vmem:[%s2 + $0x118] sm:$0xff]
    %v89 = vld [vmem:[%s2 + $0x120] sm:$0xff]
    %v90 = vld [vmem:[%s2 + $0x128] sm:$0xff]
    %v91 = vld [vmem:[%s2 + $0x130] sm:$0xff]
    %v92 = vld [vmem:[%s2 + $0x138] sm:$0xff]
    %v93 = vld [vmem:[%s2 + $0x140] sm:$0xff]
    %v94 = vld [vmem:[%s2 + $0x148] sm:$0xff]
    %v95 = vld [vmem:[%s2 + $0x150] sm:$0xff]
    %v96 = vld [vmem:[%s2 + $0x158] sm:$0xff]
    %v97 = vld [vmem:[%s2 + $0x160] sm:$0xff]
    %v98 = vld [vmem:[%s2 + $0x168] sm:$0xff]
    %v99 = vld [vmem:[%s2 + $0x170] sm:$0xff]
    %v100 = vld [vmem:[%s2 + $0x178] sm:$0xff]
    %v101 = vld [vmem:[%s2 + $0x180] sm:$0xff]
    %v102 = vld [vmem:[%s2 + $0x188] sm:$0xff]
    %v103 = vld [vmem:[%s2 + $0x190] sm:$0xff]
    %v104 = vld [vmem:[%s2 + $0x198] sm:$0xff]
    %v105 = vld [vmem:[%s2 + $0x1a0] sm:$0xff]
    %v106 = vld [vmem:[%s2 + $0x1a8] sm:$0xff]
    %v107 = vld [vmem:[%s2 + $0x1b0] sm:$0xff]
    %v108 = vld [vmem:[%s2 + $0x1b8] sm:$0xff]
    %v109 = vld [vmem:[%s2 + $0x1c0] sm:$0xff]
    %v110 = vld [vmem:[%s2 + $0x1c8] sm:$0xff]
    %v111 = vld [vmem:[%s2 + $0x1d0] sm:$0xff]
    %v112 = vld [vmem:[%s2 + $0x1d8] sm:$0xff]
    %v113 = vld [vmem:[%s2 + $0x1e0] sm:$0xff]
    %v114 = vld [vmem:[%s2 + $0x1e8] sm:$0xff]
    %v115 = vld [vmem:[%s2 + $0x1f0] sm:$0xff]
    %v116 = vld [vmem:[%s2 + $0x1f8] sm:$0xff]
    %v117 = vld [vmem:[%s3] sm:$0x3]
    %v119 = vlaneseq
    %v120 = vshrl.u32 %v119, 7
    %v121 = vsub.s32 0, %v120
    %v122 = vrot.slane %v117, %v121
    %v123 = vlaneseq
    %v124 = vshrl.u32 %v123, 7
    %v125 = vsub.s32 1, %v124
    %v126 = vrot.slane %v117, %v125
    %129 = vmatprep.subr.mxu0 %v84
    %130 = vmatpush1.msra.mxu0 %v83
    %131 = vmatprep.subr.mxu0 %v82
    %132 = vmatpush1.msra.mxu0 %v81
    %133 = vmatprep.subr.mxu0 %v80
    %134 = vmatpush1.msra.mxu0 %v79
    %135 = vmatprep.subr.mxu0 %v78
    %136 = vmatpush1.msra.mxu0 %v77
    %137 = vmatprep.subr.mxu0 %v76
    %138 = vmatpush1.msra.mxu0 %v75
    %139 = vmatprep.subr.mxu0 %v74
    %140 = vmatpush1.msra.mxu0 %v73
    %141 = vmatprep.subr.mxu0 %v72
    %142 = vmatpush1.msra.mxu0 %v71
    %143 = vmatprep.subr.mxu0 %v70
    %144 = vmatpush1.msra.mxu0 %v69
    %145 = vmatprep.subr.mxu0 %v68
    %146 = vmatpush1.msra.mxu0 %v67
    %147 = vmatprep.subr.mxu0 %v66
    %148 = vmatpush1.msra.mxu0 %v65
    %149 = vmatprep.subr.mxu0 %v64
    %150 = vmatpush1.msra.mxu0 %v63
    %151 = vmatprep.subr.mxu0 %v62
    %152 = vmatpush1.msra.mxu0 %v61
    %153 = vmatprep.subr.mxu0 %v60
    %154 = vmatpush1.msra.mxu0 %v59
    %155 = vmatprep.subr.mxu0 %v58
    %156 = vmatpush1.msra.mxu0 %v57
    %157 = vmatprep.subr.mxu0 %v56
    %158 = vmatpush1.msra.mxu0 %v55
    %159 = vmatprep.subr.mxu0 %v54
    %160 = vmatpush1.msra.mxu0 %v53
    %161 = vmatprep.subr.mxu0 %v116
    %162 = vmatpush2.msra.mxu0 %v115
    %163 = vmatprep.subr.mxu0 %v114
    %164 = vmatpush2.msra.mxu0 %v113
    %165 = vmatprep.subr.mxu0 %v112
    %166 = vmatpush2.msra.mxu0 %v111
    %167 = vmatprep.subr.mxu0 %v110
    %168 = vmatpush2.msra.mxu0 %v109
    %169 = vmatprep.subr.mxu0 %v108
    %170 = vmatpush2.msra.mxu0 %v107
    %171 = vmatprep.subr.mxu0 %v106
    %172 = vmatpush2.msra.mxu0 %v105
    %173 = vmatprep.subr.mxu0 %v104
    %174 = vmatpush2.msra.mxu0 %v103
    %175 = vmatprep.subr.mxu0 %v102
    %176 = vmatpush2.msra.mxu0 %v101
    %177 = vmatprep.subr.mxu0 %v100
    %178 = vmatpush2.msra.mxu0 %v99
    %179 = vmatprep.subr.mxu0 %v98
    %180 = vmatpush2.msra.mxu0 %v97
    %181 = vmatprep.subr.mxu0 %v96
    %182 = vmatpush2.msra.mxu0 %v95
    %183 = vmatprep.subr.mxu0 %v94
    %184 = vmatpush2.msra.mxu0 %v93
    %185 = vmatprep.subr.mxu0 %v92
    %186 = vmatpush2.msra.mxu0 %v91
    %187 = vmatprep.subr.mxu0 %v90
    %188 = vmatpush2.msra.mxu0 %v89
    %189 = vmatprep.subr.mxu0 %v88
    %190 = vmatpush2.msra.mxu0 %v87
    %191 = vmatprep.subr.mxu0 %v86
    %192 = vmatpush2.msra.mxu0 %v85
    %193 = vmatprep.mubr.f32.mxu0 %v52
    %194 = vmatmul.mubr.f32.gmra.mxu0 %v51
    %v195 = vpop.f32.mrf.mxu0
    %v196 = vadd.f32 %v122, %v195
    %v197 = vpop.f32.mrf.mxu0
    %v198 = vadd.f32 %v126, %v197
    %199 = vdwg.mxu0
    %v200 = vtanh.pop %v196
    %v201 = vtanh.pop %v198
    %v202 = vld [vmem:[%s4] sm:$0xff]
    %v203 = vld [vmem:[%s4 + $0x8] sm:$0xff]
    %v204 = vld [vmem:[%s4 + $0x10] sm:$0xff]
    %v205 = vld [vmem:[%s4 + $0x18] sm:$0xff]
    %v206 = vld [vmem:[%s4 + $0x20] sm:$0xff]
    %v207 = vld [vmem:[%s4 + $0x28] sm:$0xff]
    %v208 = vld [vmem:[%s4 + $0x30] sm:$0xff]
    %v209 = vld [vmem:[%s4 + $0x38] sm:$0xff]
    %v210 = vld [vmem:[%s4 + $0x40] sm:$0xff]
    %v211 = vld [vmem:[%s4 + $0x48] sm:$0xff]
    %v212 = vld [vmem:[%s4 + $0x50] sm:$0xff]
    %v213 = vld [vmem:[%s4 + $0x58] sm:$0xff]
    %v214 = vld [vmem:[%s4 + $0x60] sm:$0xff]
    %v215 = vld [vmem:[%s4 + $0x68] sm:$0xff]
    %v216 = vld [vmem:[%s4 + $0x70] sm:$0xff]
    %v217 = vld [vmem:[%s4 + $0x78] sm:$0xff]
    %v218 = vld [vmem:[%s4 + $0x80] sm:$0xff]
    %v219 = vld [vmem:[%s4 + $0x88] sm:$0xff]
    %v220 = vld [vmem:[%s4 + $0x90] sm:$0xff]
    %v221 = vld [vmem:[%s4 + $0x98] sm:$0xff]
    %v222 = vld [vmem:[%s4 + $0xa0] sm:$0xff]
    %v223 = vld [vmem:[%s4 + $0xa8] sm:$0xff]
    %v224 = vld [vmem:[%s4 + $0xb0] sm:$0xff]
    %v225 = vld [vmem:[%s4 + $0xb8] sm:$0xff]
    %v226 = vld [vmem:[%s4 + $0xc0] sm:$0xff]
    %v227 = vld [vmem:[%s4 + $0xc8] sm:$0xff]
    %v228 = vld [vmem:[%s4 + $0xd0] sm:$0xff]
    %v229 = vld [vmem:[%s4 + $0xd8] sm:$0xff]
    %v230 = vld [vmem:[%s4 + $0xe0] sm:$0xff]
    %v231 = vld [vmem:[%s4 + $0xe8] sm:$0xff]
    %v232 = vld [vmem:[%s4 + $0xf0] sm:$0xff]
    %v233 = vld [vmem:[%s4 + $0xf8] sm:$0xff]
    %v234 = vld [vmem:[#allocation2] sm:$0xff]
    %vm235 = vcmp.eq.f32.partialorder %v234, 0.0
    %v236 = vsel %vm235, 1, 0
    %v237 = vcvt.s32.f32 %v236
    %v238 = vmul.f32 %v237, -10000.0
    %239 = vmatprep.subr.mxu0 0.0
    %240 = vmatpush1.msra.mxu0 %v217
    %241 = vmatprep.subr.mxu0 0.0
    %242 = vmatpush1.msra.mxu0 %v216
    %243 = vmatprep.subr.mxu0 0.0
    %244 = vmatpush1.msra.mxu0 %v215
    %245 = vmatprep.subr.mxu0 0.0
    %246 = vmatpush1.msra.mxu0 %v214
    %247 = vmatprep.subr.mxu0 0.0
    %248 = vmatpush1.msra.mxu0 %v213
    %249 = vmatprep.subr.mxu0 0.0
    %250 = vmatpush1.msra.mxu0 %v212
    %251 = vmatprep.subr.mxu0 0.0
    %252 = vmatpush1.msra.mxu0 %v211
    %253 = vmatprep.subr.mxu0 0.0
    %254 = vmatpush1.msra.mxu0 %v210
    %255 = vmatprep.subr.mxu0 0.0
    %256 = vmatpush1.msra.mxu0 %v209
    %257 = vmatprep.subr.mxu0 0.0
    %258 = vmatpush1.msra.mxu0 %v208
    %259 = vmatprep.subr.mxu0 0.0
    %260 = vmatpush1.msra.mxu0 %v207
    %261 = vmatprep.subr.mxu0 0.0
    %262 = vmatpush1.msra.mxu0 %v206
    %263 = vmatprep.subr.mxu0 0.0
    %264 = vmatpush1.msra.mxu0 %v205
    %265 = vmatprep.subr.mxu0 0.0
    %266 = vmatpush1.msra.mxu0 %v204
    %267 = vmatprep.subr.mxu0 0.0
    %268 = vmatpush1.msra.mxu0 %v203
    %269 = vmatprep.subr.mxu0 0.0
    %270 = vmatpush1.msra.mxu0 %v202
    %271 = vmatprep.subr.mxu0 0.0
    %272 = vmatpush2.msra.mxu0 %v233
    %273 = vmatprep.subr.mxu0 0.0
    %274 = vmatpush2.msra.mxu0 %v232
    %275 = vmatprep.subr.mxu0 0.0
    %276 = vmatpush2.msra.mxu0 %v231
    %277 = vmatprep.subr.mxu0 0.0
    %278 = vmatpush2.msra.mxu0 %v230
    %279 = vmatprep.subr.mxu0 0.0
    %280 = vmatpush2.msra.mxu0 %v229
    %281 = vmatprep.subr.mxu0 0.0
    %282 = vmatpush2.msra.mxu0 %v228
    %283 = vmatprep.subr.mxu0 0.0
    %284 = vmatpush2.msra.mxu0 %v227
    %285 = vmatprep.subr.mxu0 0.0
    %286 = vmatpush2.msra.mxu0 %v226
    %287 = vmatprep.subr.mxu0 0.0
    %288 = vmatpush2.msra.mxu0 %v225
    %289 = vmatprep.subr.mxu0 0.0
    %290 = vmatpush2.msra.mxu0 %v224
    %291 = vmatprep.subr.mxu0 0.0
    %292 = vmatpush2.msra.mxu0 %v223
    %293 = vmatprep.subr.mxu0 0.0
    %294 = vmatpush2.msra.mxu0 %v222
    %295 = vmatprep.subr.mxu0 0.0
    %296 = vmatpush2.msra.mxu0 %v221
    %297 = vmatprep.subr.mxu0 0.0
    %298 = vmatpush2.msra.mxu0 %v220
    %299 = vmatprep.subr.mxu0 0.0
    %300 = vmatpush2.msra.mxu0 %v219
    %301 = vmatprep.subr.mxu0 0.0
    %302 = vmatpush2.msra.mxu0 %v218
    %303 = vmatprep.mubr.f32.mxu0 %v201
    %304 = vmatmul.mubr.f32.gmra.mxu0 %v200
    %v305 = vpop.f32.mrf.mxu0
    %v306 = vadd.f32 %v238, %v305
    %v307 = vpop.f32.mrf.mxu0
    %308 = vdwg.mxu0
    %vm309 = vcmask 64512
    %v310 = vsel %vm309, %v306, -inf
    %311 = vmax.xlane.f32.xlu0 %v310
    %v312 = vpop.xlane.xlu0 %311
    %v313 = vsub.f32 %v306, %v312
    %v314 = vmul.f32 %v313, 1.442695
    %v315 = vpow.pop %v314
    %v316 = vsel %vm309, %v315, 0.0
    %317 = vadd.xlane.f32.xlu0 %v316
    %v318 = vpop.xlane.xlu0 %317
    %v319 = vrcp.pop %v318
    %v320 = vmul.f32 %v315, %v319
    %v321 = vld [vmem:[#allocation5] sm:$0xff]
    %v322 = vld [vmem:[#allocation5 + $0x8] sm:$0xff]
    %v324 = vsel %vm309, %v320, 0
    %326 = vmatprep.subr.mxu0 0.0
    %327 = vmatpush1.msra.mxu0 0.0
    %328 = vmatprep.subr.mxu0 0.0
    %329 = vmatpush1.msra.mxu0 0.0
    %330 = vmatprep.subr.mxu0 0.0
    %331 = vmatpush1.msra.mxu0 0.0
    %332 = vmatprep.subr.mxu0 0.0
    %333 = vmatpush1.msra.mxu0 0.0
    %334 = vmatprep.subr.mxu0 0.0
    %335 = vmatpush1.msra.mxu0 0.0
    %336 = vmatprep.subr.mxu0 0.0
    %337 = vmatpush1.msra.mxu0 0.0
    %338 = vmatprep.subr.mxu0 0.0
    %339 = vmatpush1.msra.mxu0 0.0
    %340 = vmatprep.subr.mxu0 0.0
    %341 = vmatpush1.msra.mxu0 0.0
    %342 = vmatprep.subr.mxu0 0.0
    %343 = vmatpush1.msra.mxu0 0.0
    %344 = vmatprep.subr.mxu0 0.0
    %345 = vmatpush1.msra.mxu0 0.0
    %346 = vmatprep.subr.mxu0 0.0
    %347 = vmatpush1.msra.mxu0 0.0
    %348 = vmatprep.subr.mxu0 0.0
    %349 = vmatpush1.msra.mxu0 0.0
    %350 = vmatprep.subr.mxu0 0.0
    %351 = vmatpush1.msra.mxu0 0.0
    %352 = vmatprep.subr.mxu0 0.0
    %353 = vmatpush1.msra.mxu0 0.0
    %354 = vmatprep.subr.mxu0 0.0
    %355 = vmatpush1.msra.mxu0 0.0
    %356 = vmatprep.subr.mxu0 %v322
    %357 = vmatpush1.msra.mxu0 %v321
    %358 = vmatprep.subr.mxu0 0.0
    %359 = vmatpush2.msra.mxu0 0.0
    %360 = vmatprep.subr.mxu0 0.0
    %361 = vmatpush2.msra.mxu0 0.0
    %362 = vmatprep.subr.mxu0 0.0
    %363 = vmatpush2.msra.mxu0 0.0
    %364 = vmatprep.subr.mxu0 0.0
    %365 = vmatpush2.msra.mxu0 0.0
    %366 = vmatprep.subr.mxu0 0.0
    %367 = vmatpush2.msra.mxu0 0.0
    %368 = vmatprep.subr.mxu0 0.0
    %369 = vmatpush2.msra.mxu0 0.0
    %370 = vmatprep.subr.mxu0 0.0
    %371 = vmatpush2.msra.mxu0 0.0
    %372 = vmatprep.subr.mxu0 0.0
    %373 = vmatpush2.msra.mxu0 0.0
    %374 = vmatprep.subr.mxu0 0.0
    %375 = vmatpush2.msra.mxu0 0.0
    %376 = vmatprep.subr.mxu0 0.0
    %377 = vmatpush2.msra.mxu0 0.0
    %378 = vmatprep.subr.mxu0 0.0
    %379 = vmatpush2.msra.mxu0 0.0
    %380 = vmatprep.subr.mxu0 0.0
    %381 = vmatpush2.msra.mxu0 0.0
    %382 = vmatprep.subr.mxu0 0.0
    %383 = vmatpush2.msra.mxu0 0.0
    %384 = vmatprep.subr.mxu0 0.0
    %385 = vmatpush2.msra.mxu0 0.0
    %386 = vmatprep.subr.mxu0 0.0
    %387 = vmatpush2.msra.mxu0 0.0
    %388 = vmatprep.subr.mxu0 0.0
    %389 = vmatpush2.msra.mxu0 0.0
    %390 = vmatprep.mubr.f32.mxu0 0.0
    %391 = vmatmul.mubr.f32.gmra.mxu0 %v324
    %v392 = vpop.f32.mrf.mxu0
    %v393 = vadd.f32 0.0, %v392
    %v394 = vpop.f32.mrf.mxu0
    %v395 = vadd.f32 0.0, %v394
    %396 = vdwg.mxu0
    %v397 = vmul.f32 %v51, %v393
    %v398 = vmul.f32 %v52, %v395
    %v399 = vld [vmem:[%s6] sm:$0xff]
    %v400 = vld [vmem:[%s6 + $0x8] sm:$0xff]
    %v401 = vld [vmem:[%s6 + $0x10] sm:$0xff]
    %v402 = vld [vmem:[%s6 + $0x18] sm:$0xff]
    %v403 = vld [vmem:[%s6 + $0x20] sm:$0xff]
    %v404 = vld [vmem:[%s6 + $0x28] sm:$0xff]
    %v405 = vld [vmem:[%s6 + $0x30] sm:$0xff]
    %v406 = vld [vmem:[%s6 + $0x38] sm:$0xff]
    %v407 = vld [vmem:[%s6 + $0x40] sm:$0xff]
    %v408 = vld [vmem:[%s6 + $0x48] sm:$0xff]
    %v409 = vld [vmem:[%s6 + $0x50] sm:$0xff]
    %v410 = vld [vmem:[%s6 + $0x58] sm:$0xff]
    %v411 = vld [vmem:[%s6 + $0x60] sm:$0xff]
    %v412 = vld [vmem:[%s6 + $0x68] sm:$0xff]
    %v413 = vld [vmem:[%s6 + $0x70] sm:$0xff]
    %v414 = vld [vmem:[%s6 + $0x78] sm:$0xff]
    %v415 = vld [vmem:[%s6 + $0x80] sm:$0xff]
    %v416 = vld [vmem:[%s6 + $0x88] sm:$0xff]
    %v417 = vld [vmem:[%s6 + $0x90] sm:$0xff]
    %v418 = vld [vmem:[%s6 + $0x98] sm:$0xff]
    %v419 = vld [vmem:[%s6 + $0xa0] sm:$0xff]
    %v420 = vld [vmem:[%s6 + $0xa8] sm:$0xff]
    %v421 = vld [vmem:[%s6 + $0xb0] sm:$0xff]
    %v422 = vld [vmem:[%s6 + $0xb8] sm:$0xff]
    %v423 = vld [vmem:[%s6 + $0xc0] sm:$0xff]
    %v424 = vld [vmem:[%s6 + $0xc8] sm:$0xff]
    %v425 = vld [vmem:[%s6 + $0xd0] sm:$0xff]
    %v426 = vld [vmem:[%s6 + $0xd8] sm:$0xff]
    %v427 = vld [vmem:[%s6 + $0xe0] sm:$0xff]
    %v428 = vld [vmem:[%s6 + $0xe8] sm:$0xff]
    %v429 = vld [vmem:[%s6 + $0xf0] sm:$0xff]
    %v430 = vld [vmem:[%s6 + $0xf8] sm:$0xff]
    %431 = vmatprep.subr.mxu0 0.0
    %432 = vmatpush1.msra.mxu0 %v414
    %433 = vmatprep.subr.mxu0 0.0
    %434 = vmatpush1.msra.mxu0 %v413
    %435 = vmatprep.subr.mxu0 0.0
    %436 = vmatpush1.msra.mxu0 %v412
    %437 = vmatprep.subr.mxu0 0.0
    %438 = vmatpush1.msra.mxu0 %v411
    %439 = vmatprep.subr.mxu0 0.0
    %440 = vmatpush1.msra.mxu0 %v410
    %441 = vmatprep.subr.mxu0 0.0
    %442 = vmatpush1.msra.mxu0 %v409
    %443 = vmatprep.subr.mxu0 0.0
    %444 = vmatpush1.msra.mxu0 %v408
    %445 = vmatprep.subr.mxu0 0.0
    %446 = vmatpush1.msra.mxu0 %v407
    %447 = vmatprep.subr.mxu0 0.0
    %448 = vmatpush1.msra.mxu0 %v406
    %449 = vmatprep.subr.mxu0 0.0
    %450 = vmatpush1.msra.mxu0 %v405
    %451 = vmatprep.subr.mxu0 0.0
    %452 = vmatpush1.msra.mxu0 %v404
    %453 = vmatprep.subr.mxu0 0.0
    %454 = vmatpush1.msra.mxu0 %v403
    %455 = vmatprep.subr.mxu0 0.0
    %456 = vmatpush1.msra.mxu0 %v402
    %457 = vmatprep.subr.mxu0 0.0
    %458 = vmatpush1.msra.mxu0 %v401
    %459 = vmatprep.subr.mxu0 0.0
    %460 = vmatpush1.msra.mxu0 %v400
    %461 = vmatprep.subr.mxu0 0.0
    %462 = vmatpush1.msra.mxu0 %v399
    %463 = vmatprep.subr.mxu0 0.0
    %464 = vmatpush2.msra.mxu0 %v430
    %465 = vmatprep.subr.mxu0 0.0
    %466 = vmatpush2.msra.mxu0 %v429
    %467 = vmatprep.subr.mxu0 0.0
    %468 = vmatpush2.msra.mxu0 %v428
    %469 = vmatprep.subr.mxu0 0.0
    %470 = vmatpush2.msra.mxu0 %v427
    %471 = vmatprep.subr.mxu0 0.0
    %472 = vmatpush2.msra.mxu0 %v426
    %473 = vmatprep.subr.mxu0 0.0
    %474 = vmatpush2.msra.mxu0 %v425
    %475 = vmatprep.subr.mxu0 0.0
    %476 = vmatpush2.msra.mxu0 %v424
    %477 = vmatprep.subr.mxu0 0.0
    %478 = vmatpush2.msra.mxu0 %v423
    %479 = vmatprep.subr.mxu0 0.0
    %480 = vmatpush2.msra.mxu0 %v422
    %481 = vmatprep.subr.mxu0 0.0
    %482 = vmatpush2.msra.mxu0 %v421
    %483 = vmatprep.subr.mxu0 0.0
    %484 = vmatpush2.msra.mxu0 %v420
    %485 = vmatprep.subr.mxu0 0.0
    %486 = vmatpush2.msra.mxu0 %v419
    %487 = vmatprep.subr.mxu0 0.0
    %488 = vmatpush2.msra.mxu0 %v418
    %489 = vmatprep.subr.mxu0 0.0
    %490 = vmatpush2.msra.mxu0 %v417
    %491 = vmatprep.subr.mxu0 0.0
    %492 = vmatpush2.msra.mxu0 %v416
    %493 = vmatprep.subr.mxu0 0.0
    %494 = vmatpush2.msra.mxu0 %v415
    %495 = vmatprep.mubr.f32.mxu0 %v398
    %496 = vmatmul.mubr.f32.gmra.mxu0 %v397
    %v497 = vpop.f32.mrf.mxu0
    %v498 = vadd.f32 0.0, %v497
    %v499 = vpop.f32.mrf.mxu0
    %500 = vdwg.mxu0
    %vm501 = vcmask 261120
    %502 = vst.msk [vmem:[#allocation7] sm:$0xff] %vm501, %v498
    // Predicated region
    $region38: #{tpu_custom_call.1} parent=1 // pred_check
      _
    $region39: #{tpu_custom_call.1} parent=1 // pred_check_branch
      %504 = sbr.rel (0) target = $region41
    $region40: #{tpu_custom_call.1} parent=1 // pred_region
      %s506 = ssub.s32 128, 128
      %507 = vsyncadd [#allocation4], %s506
      %s509 = sshll.u32 [#allocation7], 4
      %s510 = int_to_ptr.vmem [resolvable:$true] %s509
      %512 = dma.vmem_to_hbm [thread:$0]  %s510, 128, %s7, [#allocation4]
    $region41: #{tpu_custom_call.1} parent=1 // pred_fallthru
      _
    // Predicated region
    $region42: #{tpu_custom_call.1} parent=1 // pred_check
      _
    $region43: #{tpu_custom_call.1} parent=1 // pred_check_branch
      %514 = sbr.rel (0) target = $region45
    $region44: #{tpu_custom_call.1} parent=1 // pred_region
      %515 = dma.done [#allocation4], 128
    $region45: #{tpu_custom_call.1} parent=1 // pred_fallthru
      _
    %516 = vsyncpa [#allocation3], 1
    %517 = vsyncpa [#allocation6], 1
    %518 = vsyncpa [#allocation4], 1

</llo_original>
